<compile_context>
chip_gen: v6e
topology: v6e:2x2x1
jax: 0.10.0
libtpu: 0.0.40
codegen_flags: <defaults>
</compile_context>

<pallas_src>
import jax
import jax.numpy as jnp
from jax import lax
from jax.experimental import pallas as pl
from jax.experimental.pallas import tpu as pltpu

_LANES = 128
_MIB = 1 << 20
_DEFAULT_BLOCK_ROWS = 8192       # 4 MiB per f32 input block in the tiled path
_FUSED_CHUNK_BYTES = 1 * _MIB    # ~1 MiB of f32 per in-kernel scan chunk


def _round_up(x, m):
    return ((x + m - 1) // m) * m


def _vmem_capacity_bytes():
    """Physical VMEM per TensorCore (128 MiB v5e/v6e, 64 MiB v7x)."""
    try:
        info = pltpu.get_tpu_info()
        for name in ("vmem_capacity_bytes", "vmem_size_bytes", "vmem_bytes"):
            v = getattr(info, name, None)
            if v:
                return int(v)
    except Exception:
        pass
    return 64 * _MIB  # conservative fallback (v7x per-core VMEM)


def _tile_footprint_bytes(shape2, dtype):
    """VMEM bytes of an (R, C) slab after (sublane, lane) tile padding."""
    r, c = shape2
    return (_round_up(max(int(r), 1), 16) * _round_up(max(int(c), 1), _LANES)
            * jnp.dtype(dtype).itemsize)


# ---------------------------------------------------------------------------
# Fused single-pass kernel: operands VMEM-resident, two chunked scans.
# ---------------------------------------------------------------------------
def _make_fused_kernel(rows, cols, chunk_rows):
    n_full = rows // chunk_rows
    tail_rows = rows - n_full * chunk_rows
    aligned = (chunk_rows % 8 == 0)

    def kernel(p_ref, t_ref, out_ref):
        def diff_chunk(r0, nr):
            return (p_ref[pl.ds(r0, nr), :].astype(jnp.float32)
                    - t_ref[pl.ds(r0, nr), :].astype(jnp.float32))

        # ---- scan 1: running (1, cols) max of |pred - target| -------------
        def max_body(i, m):
            r0 = i * chunk_rows
            if aligned:
                r0 = pl.multiple_of(r0, 8)
            d = diff_chunk(r0, chunk_rows)
            return jnp.maximum(m, jnp.max(jnp.abs(d), axis=0, keepdims=True))

        m = jnp.zeros((1, cols), jnp.float32)  # |.| >= 0, so 0-init is safe
        if n_full:
            m = lax.fori_loop(0, n_full, max_body, m)
        if tail_rows:
            d = diff_chunk(n_full * chunk_rows, tail_rows)
            m = jnp.maximum(m, jnp.max(jnp.abs(d), axis=0, keepdims=True))

        c = 0.2 * jnp.max(m, axis=1, keepdims=True)         # (1, 1)
        half_c = 0.5 * c
        # c == 0 => every |d| <= c, l2 branch never selected (matches PyTorch,
        # which never divides for l1-masked elements); guard avoids 0/0.
        inv_2c = jnp.where(c > 0.0, 1.0 / (2.0 * c), 0.0)

        # ---- scan 2: running (1, cols) sum of the BerHu loss --------------
        def loss_chunk(r0, nr):
            d = diff_chunk(r0, nr)
            ad = jnp.abs(d)
            l2 = d * d * inv_2c + half_c                     # == (d^2+c^2)/(2c)
            loss = jnp.where(ad <= c, ad, l2)
            return jnp.sum(loss, axis=0, keepdims=True)

        def sum_body(i, s):
            r0 = i * chunk_rows
            if aligned:
                r0 = pl.multiple_of(r0, 8)
            return s + loss_chunk(r0, chunk_rows)

        s = jnp.zeros((1, cols), jnp.float32)
        if n_full:
            s = lax.fori_loop(0, n_full, sum_body, s)
        if tail_rows:
            s = s + loss_chunk(n_full * chunk_rows, tail_rows)

        out_ref[...] = jnp.sum(s, axis=1, keepdims=True)     # (1, 1)

    return kernel


# ---------------------------------------------------------------------------
# Tiled path, pass 1: per-block (8, 128) tile-aligned partial max of |diff|.
# ---------------------------------------------------------------------------
def _make_max_kernel(block_rows, valid_rows, need_mask):
    tiles = block_rows // 8

    def kernel(p_ref, t_ref, out_ref):
        abs_diff = jnp.abs(p_ref[...].astype(jnp.float32)
                           - t_ref[...].astype(jnp.float32))
        a3 = abs_diff.reshape(tiles, 8, _LANES)
        if need_mask:  # last grid block is partial -> garbage rows masked out
            row = (pl.program_id(0) * block_rows
                   + lax.broadcasted_iota(jnp.int32, a3.shape, 0) * 8
                   + lax.broadcasted_iota(jnp.int32, a3.shape, 1))
            a3 = jnp.where(row < valid_rows, a3, 0.0)  # select: NaN-safe
        out_ref[...] = jnp.max(a3, axis=0)

    return kernel


# ---------------------------------------------------------------------------
# Tiled path, pass 2: per-block (8, 128) tile-aligned partial loss sum.
# ---------------------------------------------------------------------------
def _make_sum_kernel(block_rows, valid_rows, need_mask):
    tiles = block_rows // 8

    def kernel(s_ref, p_ref, t_ref, out_ref):
        c = s_ref[0]        # 0.2 * max|diff|
        inv_2c = s_ref[1]   # 1/(2c), 0 when c == 0
        half_c = s_ref[2]   # c/2
        diff = p_ref[...].astype(jnp.float32) - t_ref[...].astype(jnp.float32)
        abs_diff = jnp.abs(diff)
        loss = jnp.where(abs_diff <= c, abs_diff, diff * diff * inv_2c + half_c)
        l3 = loss.reshape(tiles, 8, _LANES)
        if need_mask:
            row = (pl.program_id(0) * block_rows
                   + lax.broadcasted_iota(jnp.int32, l3.shape, 0) * 8
                   + lax.broadcasted_iota(jnp.int32, l3.shape, 1))
            l3 = jnp.where(row < valid_rows, l3, 0.0)
        out_ref[...] = jnp.sum(l3, axis=0)

    return kernel


def berhu_loss(prediction, target, *, block_rows=_DEFAULT_BLOCK_ROWS,
               fused_max_elems=None):
    assert prediction.shape == target.shape
    n = int(prediction.size)
    assert n > 0, "BerHuLoss on an empty tensor is undefined"

    vmem_cap = _vmem_capacity_bytes()

    # Zero-copy 2-D view (no padding, no data movement in the wrapper).
    lane_aligned = (n % _LANES == 0)
    if prediction.ndim == 0:
        p2, t2 = prediction.reshape(1, 1), target.reshape(1, 1)
    elif lane_aligned:
        p2 = prediction.reshape(n // _LANES, _LANES)
        t2 = target.reshape(n // _LANES, _LANES)
    else:
        last = int(prediction.shape[-1])
        p2 = prediction.reshape(-1, last)
        t2 = target.reshape(-1, last)

    # ---------------- fused single-pass path ------------------------------
    footprint = (_tile_footprint_bytes(p2.shape, p2.dtype)
                 + _tile_footprint_bytes(t2.shape, t2.dtype))
    if fused_max_elems is None:
        # ~3/4 of physical VMEM for the two resident operands:
        # v5e/v6e -> ~96 MiB of inputs, v7x -> ~48 MiB.
        # TODO(synk): on v7x the fused (grid-less) path runs on one TensorCore
        # only; the fused/tiled crossover there is best picked by a sweep.
        fuse = footprint <= (vmem_cap * 3) // 4
    else:
        fuse = (int(p2.shape[0]) * int(p2.shape[1])) <= int(fused_max_elems)

    if fuse:
        rows, cols = int(p2.shape[0]), int(p2.shape[1])
        chunk_rows = max(8, min(rows, _FUSED_CHUNK_BYTES // max(1, 4 * cols)))
        chunk_rows = max(8, chunk_rows - chunk_rows % 8)
        vmem_limit = int(min(vmem_cap - 2 * _MIB, footprint + 16 * _MIB))
        loss_sum = pl.pallas_call(
            _make_fused_kernel(rows, cols, chunk_rows),
            out_shape=jax.ShapeDtypeStruct((1, 1), jnp.float32),
            compiler_params=pltpu.CompilerParams(vmem_limit_bytes=vmem_limit),
        )(p2, t2)[0, 0]
        return (loss_sum / jnp.float32(n)).astype(prediction.dtype)

    # ---------------- tiled two-pass streaming path ------------------------
    if not lane_aligned:
        # TODO(synk): ragged-and-large inputs still pay one pad copy here; a
        # fully zero-copy path would need 1-D blocked streaming (or
        # allow_input_fusion).  Ragged inputs that fit VMEM take the zero-copy
        # fused path above instead.
        pad = (-n) % _LANES
        p2 = jnp.pad(prediction.reshape(-1), (0, pad)).reshape(-1, _LANES)
        t2 = jnp.pad(target.reshape(-1), (0, pad)).reshape(-1, _LANES)

    rows = int(p2.shape[0])
    itemsize = max(p2.dtype.itemsize, t2.dtype.itemsize)

    # Big blocks amortize the ~0.35us/step overhead; cap so (a) grid_n >= 2
    # (both v7x TensorCores get work) and (b) 2 inputs x 2 pipeline buffers
    # stay inside the explicit VMEM limit on every generation.
    block_rows = _round_up(max(8, int(block_rows)), 8)
    block_rows = min(block_rows, max(8, _round_up(pl.cdiv(rows, 2), 8)))
    max_block_rows = max(8, ((vmem_cap - 12 * _MIB) // (4 * _LANES * itemsize))
                         // 8 * 8)
    block_rows = min(block_rows, max_block_rows)

    grid_n = pl.cdiv(rows, block_rows)
    need_mask = (rows % block_rows) != 0

    block_bytes = block_rows * _LANES * itemsize
    vmem_limit = int(min(vmem_cap - 4 * _MIB,
                         max(32 * _MIB, 4 * block_bytes + 16 * _MIB)))

    data_spec = pl.BlockSpec((block_rows, _LANES), lambda i: (i, 0))
    part_spec = pl.BlockSpec((8, _LANES), lambda i: (i, 0))
    cparams = pltpu.CompilerParams(dimension_semantics=("parallel",),
                                   vmem_limit_bytes=vmem_limit)

    max_parts = pl.pallas_call(
        _make_max_kernel(block_rows, rows, need_mask),
        out_shape=jax.ShapeDtypeStruct((grid_n * 8, _LANES), jnp.float32),
        grid=(grid_n,),
        in_specs=[data_spec, data_spec],
        out_specs=part_spec,
        compiler_params=cparams,
    )(p2, t2)

    c = 0.2 * jnp.max(max_parts)
    half_c = 0.5 * c
    inv_2c = jnp.where(c > 0.0, 1.0 / (2.0 * c), 0.0)  # c==0 -> all-l1 -> 0 loss
    scalars = jnp.stack([c, inv_2c, half_c]).astype(jnp.float32)

    sum_parts = pl.pallas_call(
        _make_sum_kernel(block_rows, rows, need_mask),
        out_shape=jax.ShapeDtypeStruct((grid_n * 8, _LANES), jnp.float32),
        grid=(grid_n,),
        in_specs=[pl.BlockSpec(memory_space=pltpu.MemorySpace.SMEM),
                  data_spec, data_spec],
        out_specs=part_spec,
        compiler_params=cparams,
    )(scalars, p2, t2)

    return (jnp.sum(sum_parts) / jnp.float32(n)).astype(prediction.dtype)


def _berhu_loss_ref(prediction, target):
    diff = prediction.astype(jnp.float32) - target.astype(jnp.float32)
    abs_diff = jnp.abs(diff)
    c = 0.2 * jnp.max(abs_diff)
    l2 = (diff * diff + c * c) / (2.0 * c)
    loss = jnp.where(abs_diff <= c, abs_diff, l2)
    return jnp.mean(loss)


if __name__ == "__main__":
    key = jax.random.PRNGKey(0)
    ks = jax.random.split(key, 12)

    def check(pred, targ, tag, rtol=1e-4, atol=1e-6, **kw):
        out = jax.block_until_ready(berhu_loss(pred, targ, **kw))
        ref = jax.block_until_ready(_berhu_loss_ref(pred, targ))
        assert jnp.allclose(out.astype(jnp.float32), ref, rtol=rtol, atol=atol), \
            (tag, out, ref)

    # 1) Small depth-map-like NCHW input -> fused path (single chunk).
    pred = jax.random.normal(ks[0], (2, 4, 16, 16), dtype=jnp.float32)
    targ = jax.random.normal(ks[1], (2, 4, 16, 16), dtype=jnp.float32)
    check(pred, targ, "fused_small")

    # 2) Ragged numel (% 128 != 0) -> zero-copy (leading, last)-view fused path,
    #    then the same input forced onto the tiled fallback (pad + masked tail).
    pred = jax.random.normal(ks[2], (3, 5, 7, 31), dtype=jnp.float32)
    targ = jax.random.normal(ks[3], (3, 5, 7, 31), dtype=jnp.float32)
    check(pred, targ, "fused_ragged")
    check(pred, targ, "tiled_ragged", block_rows=8, fused_max_elems=0)

    # 3) Fused path exercising the chunked scans (one full chunk + tail chunk).
    pred = jax.random.normal(ks[4], (4, 4, 160, 128), dtype=jnp.float32)
    targ = jax.random.normal(ks[5], (4, 4, 160, 128), dtype=jnp.float32)
    check(pred, targ, "fused_chunked")

    # 4) Tiled path: block cap forces grid_n == 2 (keeps both v7x cores busy).
    pred = jax.random.normal(ks[6], (2, 4, 128, 128), dtype=jnp.float32)
    targ = jax.random.normal(ks[7], (2, 4, 128, 128), dtype=jnp.float32)
    check(pred, targ, "tiled_grid2", fused_max_elems=0)

    # 5) Tiled path with a partial (row-masked) last block, (8,128) partials.
    pred = jax.random.normal(ks[8], (4, 4, 128, 129), dtype=jnp.float32)
    targ = jax.random.normal(ks[9], (4, 4, 128, 129), dtype=jnp.float32)
    check(pred, targ, "tiled_masked", block_rows=640, fused_max_elems=0)

    # 6) bf16 inputs: native-dtype DMA, f32 math in-kernel.
    pred = jax.random.normal(ks[10], (2, 4, 64, 64), dtype=jnp.bfloat16)
    targ = jax.random.normal(ks[11], (2, 4, 64, 64), dtype=jnp.bfloat16)
    check(pred, targ, "fused_bf16", rtol=2e-2, atol=1e-3)

    print("KERNEL_OK")
</pallas_src>

<mosaic_0001>
module attributes {stable_mosaic.version = 11 : i64} {
  func.func @kernel(%arg0: memref<16x128xf32, #tpu.memory_space<vmem>>, %arg1: memref<16x128xf32, #tpu.memory_space<vmem>>, %arg2: memref<1x1xf32, #tpu.memory_space<vmem>>) attributes {dimension_semantics = [], scalar_prefetch = 0 : i64, scratch_operands = 0 : i64, tpu.core_type = #tpu.core_type<tc>} {
    %cst = arith.constant 0.000000e+00 : f32
    %0 = vector.broadcast %cst : f32 to vector<1x128xf32>
    %c0_i32 = arith.constant 0 : i32
    %c16_i32 = arith.constant 16 : i32
    %1 = arith.muli %c0_i32, %c16_i32 : i32
    %2 = tpu.assume_multiple %1, 8 : i32
    %3 = arith.index_cast %2 : i32 to index
    %c0 = arith.constant 0 : index
    %4 = vector.load %arg0[%3, %c0] : memref<16x128xf32, #tpu.memory_space<vmem>>, vector<16x128xf32>
    %5 = arith.index_cast %2 : i32 to index
    %c0_0 = arith.constant 0 : index
    %6 = vector.load %arg1[%5, %c0_0] : memref<16x128xf32, #tpu.memory_space<vmem>>, vector<16x128xf32>
    %7 = arith.subf %4, %6 : vector<16x128xf32>
    %8 = math.absf %7 : vector<16x128xf32>
    %cst_1 = arith.constant dense<0xFF800000> : vector<128xf32>
    %9 = vector.multi_reduction <maximumf>, %8, %cst_1 [0] : vector<16x128xf32> to vector<128xf32>
    %10 = vector.shape_cast %9 : vector<128xf32> to vector<1x128xf32>
    %11 = arith.maximumf %0, %10 : vector<1x128xf32>
    %c1_i32 = arith.constant 1 : i32
    %cst_2 = arith.constant dense<0xFF800000> : vector<1xf32>
    %12 = vector.multi_reduction <maximumf>, %11, %cst_2 [1] : vector<1x128xf32> to vector<1xf32>
    %13 = vector.shape_cast %12 : vector<1xf32> to vector<1x1xf32>
    %cst_3 = arith.constant 2.000000e-01 : f32
    %14 = vector.broadcast %cst_3 : f32 to vector<1x1xf32>
    %15 = arith.mulf %14, %13 : vector<1x1xf32>
    %cst_4 = arith.constant 5.000000e-01 : f32
    %16 = vector.broadcast %cst_4 : f32 to vector<1x1xf32>
    %17 = arith.mulf %16, %15 : vector<1x1xf32>
    %cst_5 = arith.constant 0.000000e+00 : f32
    %18 = vector.broadcast %cst_5 : f32 to vector<1x1xf32>
    %19 = arith.cmpf ogt, %15, %18 : vector<1x1xf32>
    %cst_6 = arith.constant 2.000000e+00 : f32
    %20 = vector.broadcast %cst_6 : f32 to vector<1x1xf32>
    %21 = arith.mulf %20, %15 : vector<1x1xf32>
    %cst_7 = arith.constant 1.000000e+00 : f32
    %22 = vector.broadcast %cst_7 : f32 to vector<1x1xf32>
    %23 = arith.divf %22, %21 : vector<1x1xf32>
    %cst_8 = arith.constant 0.000000e+00 : f32
    %24 = vector.broadcast %cst_8 : f32 to vector<1x1xf32>
    %25 = arith.select %19, %23, %24 : vector<1x1xi1>, vector<1x1xf32>
    %cst_9 = arith.constant 0.000000e+00 : f32
    %26 = vector.broadcast %cst_9 : f32 to vector<1x128xf32>
    %c0_i32_10 = arith.constant 0 : i32
    %c16_i32_11 = arith.constant 16 : i32
    %27 = arith.muli %c0_i32_10, %c16_i32_11 : i32
    %28 = tpu.assume_multiple %27, 8 : i32
    %29 = arith.index_cast %28 : i32 to index
    %c0_12 = arith.constant 0 : index
    %30 = vector.load %arg0[%29, %c0_12] : memref<16x128xf32, #tpu.memory_space<vmem>>, vector<16x128xf32>
    %31 = arith.index_cast %28 : i32 to index
    %c0_13 = arith.constant 0 : index
    %32 = vector.load %arg1[%31, %c0_13] : memref<16x128xf32, #tpu.memory_space<vmem>>, vector<16x128xf32>
    %33 = arith.subf %30, %32 : vector<16x128xf32>
    %34 = math.absf %33 : vector<16x128xf32>
    %35 = arith.mulf %33, %33 : vector<16x128xf32>
    %36 = vector.broadcast %25 : vector<1x1xf32> to vector<16x128xf32>
    %37 = arith.mulf %35, %36 : vector<16x128xf32>
    %38 = vector.broadcast %17 : vector<1x1xf32> to vector<16x128xf32>
    %39 = arith.addf %37, %38 : vector<16x128xf32>
    %40 = vector.broadcast %15 : vector<1x1xf32> to vector<16x128xf32>
    %41 = arith.cmpf ole, %34, %40 : vector<16x128xf32>
    %42 = arith.select %41, %34, %39 : vector<16x128xi1>, vector<16x128xf32>
    %cst_14 = arith.constant dense<0.000000e+00> : vector<128xf32>
    %43 = vector.multi_reduction <add>, %42, %cst_14 [0] : vector<16x128xf32> to vector<128xf32>
    %44 = vector.shape_cast %43 : vector<128xf32> to vector<1x128xf32>
    %45 = arith.addf %26, %44 : vector<1x128xf32>
    %c1_i32_15 = arith.constant 1 : i32
    %cst_16 = arith.constant dense<0.000000e+00> : vector<1xf32>
    %46 = vector.multi_reduction <add>, %45, %cst_16 [1] : vector<1x128xf32> to vector<1xf32>
    %47 = vector.shape_cast %46 : vector<1xf32> to vector<1x1xf32>
    %c0_17 = arith.constant 0 : index
    %c0_18 = arith.constant 0 : index
    %48 = vector.load %arg2[%c0_17, %c0_18] : memref<1x1xf32, #tpu.memory_space<vmem>>, vector<1x1xf32>
    tpu.vector_store %arg2[%c0_17, %c0_18], %47 {strides = array<i32>} : memref<1x1xf32, #tpu.memory_space<vmem>>, vector<1x1xf32>,
    return
  }
}

</mosaic_0001>

<llo_original>
// kernel: tpu_custom_call.1
$region0: #{tpu_custom_call.1}
  #allocation0 [shape = 'u32[]', space=smem, size = 0x4, offset = 0x4, fixed_abs, tag = 'smem constant byte address 0x4 - core index']
  #allocation1 [shape = 'u32[144,128]{1,0:T(1,128)}', space=vmem, size = 0x12000, scoped, tag = 'internal scratch']
  %s0 = inlined_call_operand.hbm [shape: f32[16,128], index: 0, kind: input, shape index: {}]
  %s1 = inlined_call_operand.hbm [shape: f32[16,128], index: 1, kind: input, shape index: {}]
  %s2 = inlined_call_operand.hbm [shape: f32[1,1], index: 2, kind: output, shape index: {}]
  %s3 = sld [smem:[#allocation0]]
  $region26: #{tpu_custom_call.1} parent=0
    _
  %s5 = ssub.s32 1, %s3
  %s6 = scalar_select 0, %s5, %s3
  $region1: #{tpu_custom_call.1} parent=0
    #allocation2 [shape = 'u8[8192]{0}', space=vmem, size = 0x2000, scoped, tag = 'input window, operand 0, single buffered']
    #allocation3 [shape = 's32[1]{0}', space=sflag, size = 0x4, scoped, tag = 'scoped memory for tpu_custom_call.1']
    #allocation4 [shape = 's32[1]{0}', space=sflag, size = 0x4, scoped, tag = 'scoped memory for tpu_custom_call.1']
    #allocation5 [shape = 'u8[8192]{0}', space=vmem, size = 0x2000, scoped, tag = 'input window, operand 1, single buffered']
    #allocation6 [shape = 's32[1]{0}', space=sflag, size = 0x4, scoped, tag = 'scoped memory for tpu_custom_call.1']
    #allocation7 [shape = 'u8[512]{0}', space=vmem, size = 0x400, scoped, tag = 'output window, operand 0, single buffered']
    %7 = vsyncpa [#allocation3], 0
    %8 = vsyncpa [#allocation6], 0
    %9 = vsyncpa [#allocation4], 0
    // Predicated region
    $region2: #{tpu_custom_call.1} parent=1 // pred_check
      _
    $region3: #{tpu_custom_call.1} parent=1 // pred_check_branch
      %11 = sbr.rel (0) target = $region5
    $region4: #{tpu_custom_call.1} parent=1 // pred_region
      %s13 = ssub.s32 256, 256
      %14 = vsyncadd [#allocation3], %s13
      %s15 = sshll.u32 [#allocation2], 4
      %s16 = int_to_ptr.vmem [resolvable:$true] %s15
      %21 = dma.hbm_to_vmem [thread:$0]  %s0, 256, %s16, [#allocation3], 128, 128, 8
    $region5: #{tpu_custom_call.1} parent=1 // pred_fallthru
      _
    // Predicated region
    $region6: #{tpu_custom_call.1} parent=1 // pred_check
      _
    $region7: #{tpu_custom_call.1} parent=1 // pred_check_branch
      %23 = sbr.rel (0) target = $region9
    $region8: #{tpu_custom_call.1} parent=1 // pred_region
      %s25 = ssub.s32 256, 256
      %26 = vsyncadd [#allocation6], %s25
      %s27 = sshll.u32 [#allocation5], 4
      %s28 = int_to_ptr.vmem [resolvable:$true] %s27
      %33 = dma.hbm_to_vmem [thread:$0]  %s1, 256, %s28, [#allocation6], 128, 128, 8
    $region9: #{tpu_custom_call.1} parent=1 // pred_fallthru
      _
    // Predicated region
    $region10: #{tpu_custom_call.1} parent=1 // pred_check
      _
    $region11: #{tpu_custom_call.1} parent=1 // pred_check_branch
      %35 = sbr.rel (0) target = $region13
    $region12: #{tpu_custom_call.1} parent=1 // pred_region
      %36 = dma.done [#allocation3], 256
    $region13: #{tpu_custom_call.1} parent=1 // pred_fallthru
      _
    // Predicated region
    $region14: #{tpu_custom_call.1} parent=1 // pred_check
      _
    $region15: #{tpu_custom_call.1} parent=1 // pred_check_branch
      %38 = sbr.rel (0) target = $region17
    $region16: #{tpu_custom_call.1} parent=1 // pred_region
      %39 = dma.done [#allocation6], 256
    $region17: #{tpu_custom_call.1} parent=1 // pred_fallthru
      _
    %v40 = vld [vmem:[#allocation2] sm:$0xff]
    %v41 = vld [vmem:[#allocation2 + $0x8] sm:$0xff]
    %v42 = vld [vmem:[#allocation5] sm:$0xff]
    %v43 = vld [vmem:[#allocation5 + $0x8] sm:$0xff]
    %v44 = vsub.f32 %v40, %v42
    %v45 = vsub.f32 %v41, %v43
    %v46 = vand.u32 2147483647, %v44
    %v47 = vand.u32 2147483647, %v45
    %v48 = vmax.f32 %v46, %v47
    %v49 = vrot.slane %v48, 4
    %v50 = vmax.f32 %v48, %v49
    %v51 = vrot.slane %v50, 2
    %v52 = vmax.f32 %v50, %v51
    %v53 = vrot.slane %v52, 1
    %v54 = vmax.f32 %v52, %v53
    %v55 = vmax.f32 %v54, 0.0
    %56 = vmax.xlane.f32.xlu0 %v55
    %v57 = vpop.xlane.xlu0 %56
    %v58 = vmul.f32 %v57, 0.2
    %v59 = vmul.f32 %v58, 0.5
    %vm60 = vcmp.gt.f32.partialorder %v58, 0.0
    %v61 = vmul.f32 %v58, 2.0
    %v62 = vrcp.pop %v61
    %v63 = vmul.f32 1.0, %v62
    %v64 = vsel %vm60, %v63, 0.0
    %v65 = vmul.f32 %v44, %v44
    %v66 = vmul.f32 %v45, %v45
    %v67 = vmul.f32 %v65, %v64
    %v68 = vmul.f32 %v66, %v64
    %v69 = vadd.f32 %v67, %v59
    %v70 = vadd.f32 %v68, %v59
    %vm71 = vcmp.le.f32.partialorder %v46, %v58
    %vm72 = vcmp.le.f32.partialorder %v47, %v58
    %v73 = vsel %vm71, %v46, %v69
    %v74 = vsel %vm72, %v47, %v70
    %v75 = vadd.f32 %v73, %v74
    %v76 = vrot.slane %v75, 4
    %v77 = vadd.f32 %v75, %v76
    %v78 = vrot.slane %v77, 2
    %v79 = vadd.f32 %v77, %v78
    %v80 = vrot.slane %v79, 1
    %v81 = vadd.f32 %v79, %v80
    %v82 = vadd.f32 %v81, 0.0
    %83 = vadd.xlane.f32.xlu0 %v82
    %v84 = vpop.xlane.xlu0 %83
    %vm85 = vcmask 0
    %86 = vst.msk [vmem:[#allocation7] sm:$0x1] %vm85, %v84
    // Predicated region
    $region18: #{tpu_custom_call.1} parent=1 // pred_check
      _
    $region19: #{tpu_custom_call.1} parent=1 // pred_check_branch
      %88 = sbr.rel (0) target = $region21
    $region20: #{tpu_custom_call.1} parent=1 // pred_region
      %s90 = ssub.s32 16, 16
      %91 = vsyncadd [#allocation4], %s90
      %s93 = sshll.u32 [#allocation7], 4
      %s94 = int_to_ptr.vmem [resolvable:$true] %s93
      %96 = dma.vmem_to_hbm [thread:$0]  %s94, 16, %s2, [#allocation4]
    $region21: #{tpu_custom_call.1} parent=1 // pred_fallthru
      _
    // Predicated region
    $region22: #{tpu_custom_call.1} parent=1 // pred_check
      _
    $region23: #{tpu_custom_call.1} parent=1 // pred_check_branch
      %98 = sbr.rel (0) target = $region25
    $region24: #{tpu_custom_call.1} parent=1 // pred_region
      %99 = dma.done [#allocation4], 16
    $region25: #{tpu_custom_call.1} parent=1 // pred_fallthru
      _
    %100 = vsyncpa [#allocation3], 1
    %101 = vsyncpa [#allocation6], 1
    %102 = vsyncpa [#allocation4], 1

</llo_original>
